<compile_context>
chip_gen: v5e
topology: v5e:2x2
jax: 0.10.0
libtpu: 0.0.40
codegen_flags: <defaults>
</compile_context>

<pallas_src>
import jax
import jax.numpy as jnp
from jax import lax
from jax.experimental import pallas as pl
from jax.experimental.pallas import tpu as pltpu


_N_INPUT_BUFFERS = 2  # bandwidth-bound stream: deeper than double-buffering adds nothing


def _vmem_plan():
    """Return (scoped_vmem_limit_bytes, per_input_buffer_budget_bytes), generation-aware."""
    try:
        cap = int(pltpu.get_tpu_info().vmem_capacity_bytes)
    except Exception:
        cap = 64 * 1024 * 1024  # conservative fallback: v7x physical VMEM per TensorCore
    scoped = min(int(cap * 0.70), 96 * 1024 * 1024)        # v5e/v6e ~90 MiB, v7x ~45 MiB
    per_buffer = min(int(scoped * 0.40), 24 * 1024 * 1024)  # v5e/v6e 24 MiB, v7x ~18 MiB
    return scoped, per_buffer


def _round_down(x, q):
    return (x // q) * q


def _choose_tiles(D, H, W, itemsize, per_buffer_budget):
    """Pick (th, tw) for a (1, D, th, tw) input tile.

    tw is lane-dense (full W, or a multiple of 128); th is a multiple of the dtype
    sublane quantum (or full H). Tiles need NOT divide (H, W): the grid uses pl.cdiv
    and ragged edge blocks are masked by Pallas."""
    lane_q = 128
    sub_q = {4: 8, 2: 16, 1: 32}.get(itemsize, 8)
    col_bytes = D * itemsize                      # one (h, w) column across the full D axis
    th_min = H if H <= sub_q else sub_q

    # Width first: full-width rows give the longest contiguous HBM runs and a
    # lane-dense output slab.
    if W <= lane_q:
        tw = W                                    # full extent: always a legal block dim
    elif col_bytes * th_min * W <= per_buffer_budget:
        tw = W
    else:
        tw = _round_down(per_buffer_budget // (col_bytes * th_min), lane_q)
        tw = min(max(lane_q, tw), _round_down(W, lane_q))

    # Then grow th under the budget.
    if H <= sub_q:
        th = H
    else:
        th = _round_down(per_buffer_budget // (col_bytes * tw), sub_q)
        th = min(max(sub_q, th), H)               # multiple of sub_q, or full H — both legal
    return th, tw


def _disparity_regression_kernel(x_ref, o_ref):
    # x_ref: (1, D, th, tw) probability tile ; o_ref: (1, th, tw).
    # Accumulate sum_d x[d] * d one (th, tw) slab at a time: no (D, th, tw) temporary,
    # f32 accumulation regardless of input dtype (bf16 inputs upcast per slab).
    D = x_ref.shape[1]
    th, tw = o_ref.shape[1], o_ref.shape[2]

    def body(d, acc):
        return acc + x_ref[0, d].astype(jnp.float32) * d.astype(jnp.float32)

    acc = lax.fori_loop(0, D, body, jnp.zeros((th, tw), jnp.float32),
                        unroll=min(D, 8))
    o_ref[0] = acc.astype(o_ref.dtype)


def _softmax_disparity_regression_kernel(x_ref, o_ref):
    # Fused softmax(axis=D) + disparity regression on one (1, D, th, tw) logits tile.
    # Two streaming passes over D (max, then exp-sum / weighted exp-sum); only
    # (th, tw) slabs are live at any time.
    D = x_ref.shape[1]
    th, tw = o_ref.shape[1], o_ref.shape[2]
    unroll = min(D, 8)

    def max_body(d, m):
        return jnp.maximum(m, x_ref[0, d].astype(jnp.float32))

    m = lax.fori_loop(0, D, max_body,
                      jnp.full((th, tw), -jnp.inf, dtype=jnp.float32),
                      unroll=unroll)

    def acc_body(d, carry):
        s, ws = carry
        e = jnp.exp(x_ref[0, d].astype(jnp.float32) - m)
        return s + e, ws + e * d.astype(jnp.float32)

    s, ws = lax.fori_loop(
        0, D, acc_body,
        (jnp.zeros((th, tw), jnp.float32), jnp.zeros((th, tw), jnp.float32)),
        unroll=unroll)
    o_ref[0] = (ws / s).astype(o_ref.dtype)


def _run(kernel, x, *, transcendental, max_input_tile_bytes=None):
    B, D, H, W = x.shape
    itemsize = x.dtype.itemsize
    scoped_vmem, per_buffer = _vmem_plan()
    if max_input_tile_bytes is not None:
        per_buffer = min(per_buffer, int(max_input_tile_bytes))
    th, tw = _choose_tiles(D, H, W, itemsize, per_buffer)
    grid = (B, pl.cdiv(H, th), pl.cdiv(W, tw))

    cost = pl.CostEstimate(
        flops=(5 if transcendental else 2) * B * D * H * W,
        transcendentals=(B * D * H * W) if transcendental else 0,
        bytes_accessed=(B * D * H * W + B * H * W) * itemsize,
    )

    return pl.pallas_call(
        kernel,
        out_shape=jax.ShapeDtypeStruct((B, H, W), x.dtype),
        grid_spec=pl.GridSpec(
            grid=grid,
            in_specs=[pl.BlockSpec((1, D, th, tw), lambda b, i, j: (b, 0, i, j))],
            out_specs=pl.BlockSpec((1, th, tw), lambda b, i, j: (b, i, j)),
        ),
        compiler_params=pltpu.CompilerParams(
            # No reduction axis lives in the grid: every axis is parallel, which also
            # lets multi-TensorCore chips shard (B, H-tiles, W-tiles) across cores.
            dimension_semantics=("parallel", "parallel", "parallel"),
            vmem_limit_bytes=scoped_vmem,
        ),
        cost_estimate=cost,
    )(x)


def disparity_regression(x, *, max_input_tile_bytes=None):
    """x: (B, D, H, W) probabilities -> (B, H, W); matches torch.sum(x * disp, 1)."""
    return _run(_disparity_regression_kernel, x, transcendental=False,
                max_input_tile_bytes=max_input_tile_bytes)


def softmax_disparity_regression(logits, *, max_input_tile_bytes=None):
    """logits: (B, D, H, W) -> (B, H, W); fused softmax(dim=1) + disparity regression."""
    return _run(_softmax_disparity_regression_kernel, logits, transcendental=True,
                max_input_tile_bytes=max_input_tile_bytes)


def disparity_regression_ref(x):
    B, D, H, W = x.shape
    disp = jnp.arange(D, dtype=jnp.float32).reshape(1, D, 1, 1)
    return jnp.sum(x.astype(jnp.float32) * disp, axis=1).astype(x.dtype)


if __name__ == "__main__":
    key = jax.random.PRNGKey(0)

    # --- small, evenly-tiled case ---------------------------------------------------
    B, maxdisp, H, W = 2, 8, 16, 16
    logits = jax.random.normal(key, (B, maxdisp, H, W), dtype=jnp.float32)
    x = jax.nn.softmax(logits, axis=1)   # the surrounding net feeds softmax over D
    ref = disparity_regression_ref(x)

    out = jax.block_until_ready(disparity_regression(x))
    assert out.shape == (B, H, W)
    assert jnp.allclose(out, ref, atol=1e-4, rtol=1e-4)

    out_fused = jax.block_until_ready(softmax_disparity_regression(logits))
    assert out_fused.shape == (B, H, W)
    assert jnp.allclose(out_fused, ref, atol=1e-4, rtol=1e-4)

    # --- ragged spatial dims (H % 8 != 0, W % 128 != 0) with forced-small tiles ------
    # exercises the masked edge-block path that replaced the old full-extent fallback.
    logits_r = jax.random.normal(jax.random.fold_in(key, 1),
                                 (1, maxdisp, 20, 200), dtype=jnp.float32)
    x_r = jax.nn.softmax(logits_r, axis=1)
    ref_r = disparity_regression_ref(x_r)

    out_r = jax.block_until_ready(
        disparity_regression(x_r, max_input_tile_bytes=20 * 1024))
    assert out_r.shape == (1, 20, 200)
    assert jnp.allclose(out_r, ref_r, atol=1e-4, rtol=1e-4)

    out_rf = jax.block_until_ready(
        softmax_disparity_regression(logits_r, max_input_tile_bytes=20 * 1024))
    assert jnp.allclose(out_rf, ref_r, atol=1e-4, rtol=1e-4)

    # --- bf16 input path (halves HBM bytes; kernels accumulate in f32) ---------------
    logits_bf16 = logits.astype(jnp.bfloat16)
    ref_bf16 = disparity_regression_ref(
        jax.nn.softmax(logits_bf16.astype(jnp.float32), axis=1))
    out_bf16 = jax.block_until_ready(softmax_disparity_regression(logits_bf16))
    assert out_bf16.dtype == jnp.bfloat16
    assert jnp.allclose(out_bf16.astype(jnp.float32), ref_bf16, atol=5e-2)

    print("KERNEL_OK")
</pallas_src>

<mosaic_0001>
module attributes {stable_mosaic.version = 11 : i64} {
  func.func @_disparity_regression_kernel(%arg0: i32, %arg1: i32, %arg2: i32, %arg3: memref<1x8x16x16xf32, #tpu.memory_space<vmem>>, %arg4: memref<1x16x16xf32, #tpu.memory_space<vmem>>) attributes {dimension_semantics = [#tpu.dimension_semantics<parallel>, #tpu.dimension_semantics<parallel>, #tpu.dimension_semantics<parallel>], iteration_bounds = array<i64: 2, 1, 1>, scalar_prefetch = 0 : i64, scratch_operands = 0 : i64, tpu.core_type = #tpu.core_type<tc>, window_params = [{transform_indices = @transform_0, window_bounds = array<i64: 1, 8, 16, 16>}, {transform_indices = @transform_1, window_bounds = array<i64: 1, 16, 16>}]} {
    %cst = arith.constant 0.000000e+00 : f32
    %0 = vector.broadcast %cst : f32 to vector<16x16xf32>
    %c0_i32 = arith.constant 0 : i32
    %c0 = arith.constant 0 : index
    %1 = arith.index_cast %c0_i32 : i32 to index
    %c0_0 = arith.constant 0 : index
    %c0_1 = arith.constant 0 : index
    %2 = vector.load %arg3[%c0, %1, %c0_0, %c0_1] : memref<1x8x16x16xf32, #tpu.memory_space<vmem>>, vector<1x1x16x16xf32>
    %3 = vector.shape_cast %2 : vector<1x1x16x16xf32> to vector<16x16xf32>
    %4 = arith.sitofp %c0_i32 : i32 to f32
    %5 = vector.broadcast %4 : f32 to vector<16x16xf32>
    %6 = arith.mulf %3, %5 : vector<16x16xf32>
    %7 = arith.addf %0, %6 : vector<16x16xf32>
    %c1_i32 = arith.constant 1 : i32
    %c0_2 = arith.constant 0 : index
    %8 = arith.index_cast %c1_i32 : i32 to index
    %c0_3 = arith.constant 0 : index
    %c0_4 = arith.constant 0 : index
    %9 = vector.load %arg3[%c0_2, %8, %c0_3, %c0_4] : memref<1x8x16x16xf32, #tpu.memory_space<vmem>>, vector<1x1x16x16xf32>
    %10 = vector.shape_cast %9 : vector<1x1x16x16xf32> to vector<16x16xf32>
    %11 = arith.sitofp %c1_i32 : i32 to f32
    %12 = vector.broadcast %11 : f32 to vector<16x16xf32>
    %13 = arith.mulf %10, %12 : vector<16x16xf32>
    %14 = arith.addf %7, %13 : vector<16x16xf32>
    %c2_i32 = arith.constant 2 : i32
    %c0_5 = arith.constant 0 : index
    %15 = arith.index_cast %c2_i32 : i32 to index
    %c0_6 = arith.constant 0 : index
    %c0_7 = arith.constant 0 : index
    %16 = vector.load %arg3[%c0_5, %15, %c0_6, %c0_7] : memref<1x8x16x16xf32, #tpu.memory_space<vmem>>, vector<1x1x16x16xf32>
    %17 = vector.shape_cast %16 : vector<1x1x16x16xf32> to vector<16x16xf32>
    %18 = arith.sitofp %c2_i32 : i32 to f32
    %19 = vector.broadcast %18 : f32 to vector<16x16xf32>
    %20 = arith.mulf %17, %19 : vector<16x16xf32>
    %21 = arith.addf %14, %20 : vector<16x16xf32>
    %c3_i32 = arith.constant 3 : i32
    %c0_8 = arith.constant 0 : index
    %22 = arith.index_cast %c3_i32 : i32 to index
    %c0_9 = arith.constant 0 : index
    %c0_10 = arith.constant 0 : index
    %23 = vector.load %arg3[%c0_8, %22, %c0_9, %c0_10] : memref<1x8x16x16xf32, #tpu.memory_space<vmem>>, vector<1x1x16x16xf32>
    %24 = vector.shape_cast %23 : vector<1x1x16x16xf32> to vector<16x16xf32>
    %25 = arith.sitofp %c3_i32 : i32 to f32
    %26 = vector.broadcast %25 : f32 to vector<16x16xf32>
    %27 = arith.mulf %24, %26 : vector<16x16xf32>
    %28 = arith.addf %21, %27 : vector<16x16xf32>
    %c4_i32 = arith.constant 4 : i32
    %c0_11 = arith.constant 0 : index
    %29 = arith.index_cast %c4_i32 : i32 to index
    %c0_12 = arith.constant 0 : index
    %c0_13 = arith.constant 0 : index
    %30 = vector.load %arg3[%c0_11, %29, %c0_12, %c0_13] : memref<1x8x16x16xf32, #tpu.memory_space<vmem>>, vector<1x1x16x16xf32>
    %31 = vector.shape_cast %30 : vector<1x1x16x16xf32> to vector<16x16xf32>
    %32 = arith.sitofp %c4_i32 : i32 to f32
    %33 = vector.broadcast %32 : f32 to vector<16x16xf32>
    %34 = arith.mulf %31, %33 : vector<16x16xf32>
    %35 = arith.addf %28, %34 : vector<16x16xf32>
    %c5_i32 = arith.constant 5 : i32
    %c0_14 = arith.constant 0 : index
    %36 = arith.index_cast %c5_i32 : i32 to index
    %c0_15 = arith.constant 0 : index
    %c0_16 = arith.constant 0 : index
    %37 = vector.load %arg3[%c0_14, %36, %c0_15, %c0_16] : memref<1x8x16x16xf32, #tpu.memory_space<vmem>>, vector<1x1x16x16xf32>
    %38 = vector.shape_cast %37 : vector<1x1x16x16xf32> to vector<16x16xf32>
    %39 = arith.sitofp %c5_i32 : i32 to f32
    %40 = vector.broadcast %39 : f32 to vector<16x16xf32>
    %41 = arith.mulf %38, %40 : vector<16x16xf32>
    %42 = arith.addf %35, %41 : vector<16x16xf32>
    %c6_i32 = arith.constant 6 : i32
    %c0_17 = arith.constant 0 : index
    %43 = arith.index_cast %c6_i32 : i32 to index
    %c0_18 = arith.constant 0 : index
    %c0_19 = arith.constant 0 : index
    %44 = vector.load %arg3[%c0_17, %43, %c0_18, %c0_19] : memref<1x8x16x16xf32, #tpu.memory_space<vmem>>, vector<1x1x16x16xf32>
    %45 = vector.shape_cast %44 : vector<1x1x16x16xf32> to vector<16x16xf32>
    %46 = arith.sitofp %c6_i32 : i32 to f32
    %47 = vector.broadcast %46 : f32 to vector<16x16xf32>
    %48 = arith.mulf %45, %47 : vector<16x16xf32>
    %49 = arith.addf %42, %48 : vector<16x16xf32>
    %c7_i32 = arith.constant 7 : i32
    %c0_20 = arith.constant 0 : index
    %50 = arith.index_cast %c7_i32 : i32 to index
    %c0_21 = arith.constant 0 : index
    %c0_22 = arith.constant 0 : index
    %51 = vector.load %arg3[%c0_20, %50, %c0_21, %c0_22] : memref<1x8x16x16xf32, #tpu.memory_space<vmem>>, vector<1x1x16x16xf32>
    %52 = vector.shape_cast %51 : vector<1x1x16x16xf32> to vector<16x16xf32>
    %53 = arith.sitofp %c7_i32 : i32 to f32
    %54 = vector.broadcast %53 : f32 to vector<16x16xf32>
    %55 = arith.mulf %52, %54 : vector<16x16xf32>
    %56 = arith.addf %49, %55 : vector<16x16xf32>
    %c8_i32 = arith.constant 8 : i32
    %c0_23 = arith.constant 0 : index
    %c0_24 = arith.constant 0 : index
    %c0_25 = arith.constant 0 : index
    %57 = vector.load %arg4[%c0_23, %c0_24, %c0_25] : memref<1x16x16xf32, #tpu.memory_space<vmem>>, vector<1x16x16xf32>
    %58 = vector.shape_cast %57 : vector<1x16x16xf32> to vector<16x16xf32>
    %59 = vector.shape_cast %56 : vector<16x16xf32> to vector<1x16x16xf32>
    tpu.vector_store %arg4[%c0_23, %c0_24, %c0_25], %59 {strides = array<i32>} : memref<1x16x16xf32, #tpu.memory_space<vmem>>, vector<1x16x16xf32>,
    return
  }
  func.func @transform_0(%arg0: i32, %arg1: i32, %arg2: i32) -> (i32, i32, i32, i32) {
    %c0_i32 = arith.constant 0 : i32
    %c0_i32_0 = arith.constant 0 : i32
    return %arg0, %c0_i32, %arg1, %arg2 : i32, i32, i32, i32
  }
  func.func @transform_1(%arg0: i32, %arg1: i32, %arg2: i32) -> (i32, i32, i32) {
    %c0_i32 = arith.constant 0 : i32
    return %arg0, %arg1, %arg2 : i32, i32, i32
  }
}

</mosaic_0001>

<llo_original>
// kernel: tpu_custom_call.1
$region0: #{tpu_custom_call.1}
  #allocation0 [shape = 'u32[]', space=smem, size = 0x4, offset = 0x4, fixed_abs, tag = 'smem constant byte address 0x4 - core index']
  #allocation1 [shape = 'u32[72,128]{1,0:T(1,128)}', space=vmem, size = 0x9000, scoped, tag = 'internal scratch']
  %s0 = inlined_call_operand.hbm [shape: f32[2,8,16,16], index: 0, kind: input, shape index: {}]
  %s1 = inlined_call_operand.hbm [shape: f32[2,16,16], index: 1, kind: output, shape index: {}]
  %s2 = sld [smem:[#allocation0]]
  $region41: #{tpu_custom_call.1} parent=0
    _
  %s4 = ssub.s32 1, %s2
  %s5 = scalar_select 0, %s4, %s2
  $region1: #{tpu_custom_call.1} parent=0
    #allocation2 [shape = 'u8[131072]{0}', space=vmem, size = 0x20000, scoped, tag = 'input window, operand 0']
    #allocation3 [shape = 's32[2]{0}', space=sflag, size = 0x8, scoped, tag = 'scoped memory for tpu_custom_call.1']
    #allocation4 [shape = 's32[2]{0}', space=sflag, size = 0x8, scoped, tag = 'scoped memory for tpu_custom_call.1']
    #allocation5 [shape = 'u8[16384]{0}', space=vmem, size = 0x4000, scoped, tag = 'output window, operand 0']
    %6 = vsyncpa [#allocation3], 0
    %s7 = scalar_lea.sflag [#allocation3], 1
    %8 = vsyncpa %s7, 0
    %9 = vsyncpa [#allocation4], 0
    %s10 = scalar_lea.sflag [#allocation4], 1
    %11 = vsyncpa %s10, 0
    loop: start=0, step=1, limit=4
    $region2: #{tpu_custom_call.1} parent=1 // loop_pre_header
      _
    $region3: #{tpu_custom_call.1} parent=1 // loop_header
      %s13 = sphi 0, %s17
      %p14 = scmp.ge.s32.totalorder %s13, 4
      %s20 = sphi 0, %s39
      %s21 = sphi 0, %s35
      %s22 = sphi 0, %s31
      %s23 = sphi 0, %s20
      %s24 = sphi 0, %s21
      %s25 = sphi 0, %s22
      %s26 = sphi 0, %s23
      %s27 = sphi 0, %s24
      %s28 = sphi 0, %s25
      %s46 = sphi 0, %s48
      %s49 = sphi 0, %s46
      %s50 = sphi 0, %s49
      %s66 = sphi 0, %s50
      %s76 = sphi 0, %s78
      %s79 = sphi 0, %s76
      %s80 = sphi 0, %s79
      %s96 = sphi 0, %s80
    $region4: #{tpu_custom_call.1} parent=1 // loop_header_branch
      %16 = sbr.rel (%p14) target = $region8
    $region5: #{tpu_custom_call.1} parent=1 // loop_body
      %s18 = ssub.s32 %s13, 1
      %s19 = ssub.s32 %s13, 2
      %s29 = sadd.s32 1, %s22
      %p30 = scmp.ge.s32.totalorder %s29, 1
      %s31 = scalar_select %p30, 0, %s29
      %s32 = sadd.s32 1, %s21
      %s33 = scalar_select %p30, %s32, %s21
      %p34 = scmp.ge.s32.totalorder %s33, 1
      %s35 = scalar_select %p34, 0, %s33
      %s36 = sadd.s32 1, %s20
      %s37 = scalar_select %p34, %s36, %s20
      %p38 = scmp.ge.s32.totalorder %s37, 2
      %s39 = scalar_select %p38, 0, %s37
      %s40 = ssub.s32 %s20, %s39
      %s41 = ssub.s32 %s21, %s35
      %s42 = sor.u32 %s40, %s41
      %s43 = ssub.s32 %s22, %s31
      %s44 = sor.u32 %s42, %s43
      %p45 = scmp.eq.s32.totalorder %s44, 0
      %s47 = sadd.s32 %s46, 1
      %s48 = scalar_select %p45, %s46, %s47
      %p51 = pneg %p45
      %p52 = scmp.eq.s32.totalorder %s13, 1
      %p53 = por %p51, %p52
      %p54 = scmp.ne.s32.totalorder %s46, %s49
      %p55 = scmp.eq.s32.totalorder %s13, 0
      %p56 = por %p54, %p55
      %p57 = scmp.ne.s32.totalorder %s46, %s49
      %p58 = scmp.eq.s32.totalorder %s18, 1
      %p59 = por %p57, %p58
      %p60 = scmp.ne.s32.totalorder %s49, %s50
      %p61 = scmp.eq.s32.totalorder %s18, 0
      %p62 = por %p60, %p61
      %p63 = scmp.ne.s32.totalorder %s49, %s50
      %p64 = scmp.eq.s32.totalorder %s19, 1
      %p65 = por %p63, %p64
      %p67 = scmp.ne.s32.totalorder %s50, %s66
      %p68 = scmp.eq.s32.totalorder %s19, 0
      %p69 = por %p67, %p68
      %s70 = ssub.s32 %s20, %s39
      %s71 = ssub.s32 %s21, %s35
      %s72 = sor.u32 %s70, %s71
      %s73 = ssub.s32 %s22, %s31
      %s74 = sor.u32 %s72, %s73
      %p75 = scmp.eq.s32.totalorder %s74, 0
      %s77 = sadd.s32 %s76, 1
      %s78 = scalar_select %p75, %s76, %s77
      %p81 = pneg %p75
      %p82 = scmp.eq.s32.totalorder %s13, 1
      %p83 = por %p81, %p82
      %p84 = scmp.ne.s32.totalorder %s76, %s79
      %p85 = scmp.eq.s32.totalorder %s13, 0
      %p86 = por %p84, %p85
      %p87 = scmp.ne.s32.totalorder %s76, %s79
      %p88 = scmp.eq.s32.totalorder %s18, 1
      %p89 = por %p87, %p88
      %p90 = scmp.ne.s32.totalorder %s79, %s80
      %p91 = scmp.eq.s32.totalorder %s18, 0
      %p92 = por %p90, %p91
      %p93 = scmp.ne.s32.totalorder %s79, %s80
      %p94 = scmp.eq.s32.totalorder %s19, 1
      %p95 = por %p93, %p94
      %p97 = scmp.ne.s32.totalorder %s80, %s96
      %p98 = scmp.eq.s32.totalorder %s19, 0
      %p99 = por %p97, %p98
      %p100 = scmp.le.s32.totalorder 1, %s13
      %p101 = scmp.lt.s32.totalorder %s13, 3
      %p102 = pnand %p100, %p101
      %p103 = pneg %p102
      // Predicated region
      $region9: #{tpu_custom_call.1} parent=5 // pred_check
        _
      $region10: #{tpu_custom_call.1} parent=5 // pred_check_branch
        %105 = sbr.rel (%p102) target = $region12
      $region11: #{tpu_custom_call.1} parent=5 // pred_region
        %s106 = ssub.s32 %s13, 1
      $region12: #{tpu_custom_call.1} parent=5 // pred_fallthru
        _
      %p107 = scmp.lt.s32.totalorder %s13, 2
      // Predicated region
      $region13: #{tpu_custom_call.1} parent=5 // pred_check
        %p108 = pneg %p107
      $region14: #{tpu_custom_call.1} parent=5 // pred_check_branch
        %110 = sbr.rel (%p108) target = $region16
      $region15: #{tpu_custom_call.1} parent=5 // pred_region
        // Predicated region
        $region17: #{tpu_custom_call.1} parent=15 // pred_check
          %p111 = pneg %p56
        $region18: #{tpu_custom_call.1} parent=15 // pred_check_branch
          %113 = sbr.rel (%p111) target = $region20
        $region19: #{tpu_custom_call.1} parent=15 // pred_region
          %s114 = sand.u32 %s46, 1
          %s115 = scalar_lea.sflag [#allocation3], %s114
          %s116 = sand.u32 %s46, 1
          %s117 = smul.addr %s116, 128
          %s118 = scalar_lea.vmem [#allocation2], %s117
          %s119 = smul.u32 2, %s21
          %121 = vsyncadd %s115, 0
          %s122 = sadd.s32 %s22, %s119
          %s123 = smul.addr %s20, 16
          %s124 = sadd.s32 %s122, %s123
          %s125 = smul.addr %s124, 8
          %s126 = scalar_lea.hbm %s0, %s125
          %s127 = sshll.u32 %s126, 4
          %s128 = int_to_ptr.hbm [resolvable:$true] %s127
          %s129 = sshll.u32 %s118, 4
          %s130 = int_to_ptr.vmem [resolvable:$true] %s129
          %135 = dma.hbm_to_vmem [thread:$0]  %s128, 2048, %s130, %s115, 128, 128, 8
        $region20: #{tpu_custom_call.1} parent=15 // pred_fallthru
          _
      $region16: #{tpu_custom_call.1} parent=5 // pred_fallthru
        _
      %p136 = scmp.le.s32.totalorder 1, %s13
      %p137 = scmp.lt.s32.totalorder %s13, 3
      %p138 = pnand %p136, %p137
      %p139 = pneg %p138
      // Predicated region
      $region21: #{tpu_custom_call.1} parent=5 // pred_check
        _
      $region22: #{tpu_custom_call.1} parent=5 // pred_check_branch
        %141 = sbr.rel (%p138) target = $region24
      $region23: #{tpu_custom_call.1} parent=5 // pred_region
        %s142 = ssub.s32 %s13, 1
        %s143 = sand.u32 %s49, 1
        %s144 = scalar_lea.sflag [#allocation3], %s143
        %s145 = sand.u32 %s49, 1
        %s146 = smul.addr %s145, 128
        %s147 = scalar_lea.vmem [#allocation2], %s146
        // Predicated region
        $region25: #{tpu_custom_call.1} parent=23 // pred_check
          %p148 = pneg %p62
        $region26: #{tpu_custom_call.1} parent=23 // pred_check_branch
          %150 = sbr.rel (%p148) target = $region28
        $region27: #{tpu_custom_call.1} parent=23 // pred_region
          %152 = dma.done %s144, 2048
        $region28: #{tpu_custom_call.1} parent=23 // pred_fallthru
          _
        %s153 = sand.u32 %s49, 1
        %s154 = scalar_lea.sflag [#allocation3], %s153
        %s155 = sand.u32 %s49, 1
        %s156 = smul.addr %s155, 128
        %s157 = scalar_lea.vmem [#allocation2], %s156
        %p158 = pneg %p62
        %p159 = pneg %p59
        %p160 = pneg %p92
        %p161 = pneg %p89
        %s162 = sand.u32 %s79, 1
        %s163 = scalar_lea.sflag [#allocation4], %s162
        %s164 = sand.u32 %s79, 1
        %s165 = smul.addr %s164, 16
        %s166 = scalar_lea.vmem [#allocation5], %s165
        %s167 = smul.u32 2, %s24
        %s168 = smul.u32 2, %s24
        %v169 = vld [vmem:[%s147] sm:$0xff]
        %v170 = vld [vmem:[%s147 + $0x8] sm:$0xff]
        %v171 = vmul.f32 %v169, 0.0
        %v172 = vmul.f32 %v170, 0.0
        %v173 = vadd.f32 %v171, 0.0
        %v174 = vadd.f32 %v172, 0.0
        %s175 = scalar_lea.vmem %s147, 16 [#allocation2]
        %v176 = vld [vmem:[%s175] sm:$0xff]
        %v177 = vld [vmem:[%s175 + $0x8] sm:$0xff]
        %v178 = vadd.f32 %v173, %v176
        %v179 = vadd.f32 %v174, %v177
        %s180 = scalar_lea.vmem %s147, 32 [#allocation2]
        %v181 = vld [vmem:[%s180] sm:$0xff]
        %v182 = vld [vmem:[%s180 + $0x8] sm:$0xff]
        %v183 = vmul.f32 %v181, 2.0
        %v184 = vmul.f32 %v182, 2.0
        %v185 = vadd.f32 %v178, %v183
        %v186 = vadd.f32 %v179, %v184
        %s187 = scalar_lea.vmem %s147, 48 [#allocation2]
        %v188 = vld [vmem:[%s187] sm:$0xff]
        %v189 = vld [vmem:[%s187 + $0x8] sm:$0xff]
        %v190 = vmul.f32 %v188, 3.0
        %v191 = vmul.f32 %v189, 3.0
        %v192 = vadd.f32 %v185, %v190
        %v193 = vadd.f32 %v186, %v191
        %s194 = scalar_lea.vmem %s147, 64 [#allocation2]
        %v195 = vld [vmem:[%s194] sm:$0xff]
        %v196 = vld [vmem:[%s194 + $0x8] sm:$0xff]
        %v197 = vmul.f32 %v195, 4.0
        %v198 = vmul.f32 %v196, 4.0
        %v199 = vadd.f32 %v192, %v197
        %v200 = vadd.f32 %v193, %v198
        %s201 = scalar_lea.vmem %s147, 80 [#allocation2]
        %v202 = vld [vmem:[%s201] sm:$0xff]
        %v203 = vld [vmem:[%s201 + $0x8] sm:$0xff]
        %v204 = vmul.f32 %v202, 5.0
        %v205 = vmul.f32 %v203, 5.0
        %v206 = vadd.f32 %v199, %v204
        %v207 = vadd.f32 %v200, %v205
        %s208 = scalar_lea.vmem %s147, 96 [#allocation2]
        %v209 = vld [vmem:[%s208] sm:$0xff]
        %v210 = vld [vmem:[%s208 + $0x8] sm:$0xff]
        %v211 = vmul.f32 %v209, 6.0
        %v212 = vmul.f32 %v210, 6.0
        %v213 = vadd.f32 %v206, %v211
        %v214 = vadd.f32 %v207, %v212
        %s215 = scalar_lea.vmem %s147, 112 [#allocation2]
        %v216 = vld [vmem:[%s215] sm:$0xff]
        %v217 = vld [vmem:[%s215 + $0x8] sm:$0xff]
        %v218 = vmul.f32 %v216, 7.0
        %v219 = vmul.f32 %v217, 7.0
        %v220 = vadd.f32 %v213, %v218
        %v221 = vadd.f32 %v214, %v219
        %vm222 = vcmask 130048
        %223 = vst.msk [vmem:[%s166] sm:$0xff] %vm222, %v220
        %224 = vst.msk [vmem:[%s166 + $0x8] sm:$0xff] %vm222, %v221
        %s225 = sand.u32 %s79, 1
        %s226 = scalar_lea.sflag [#allocation4], %s225
        %s227 = sand.u32 %s79, 1
        %s228 = smul.addr %s227, 16
        %s229 = scalar_lea.vmem [#allocation5], %s228
        // Predicated region
        $region29: #{tpu_custom_call.1} parent=23 // pred_check
          %p230 = pneg %p89
        $region30: #{tpu_custom_call.1} parent=23 // pred_check_branch
          %232 = sbr.rel (%p230) target = $region32
        $region31: #{tpu_custom_call.1} parent=23 // pred_region
          %s233 = smul.u32 2, %s24
          %235 = vsyncadd %s226, 0
          %s236 = sadd.s32 %s25, %s233
          %s237 = smul.addr %s23, 2
          %s238 = sadd.s32 %s236, %s237
          %s239 = smul.addr %s238, 8
          %s240 = scalar_lea.hbm %s1, %s239
          %s241 = sshll.u32 %s229, 4
          %s242 = int_to_ptr.vmem [resolvable:$true] %s241
          %s243 = sshll.u32 %s240, 4
          %s244 = int_to_ptr.hbm [resolvable:$true] %s243
          %249 = dma.vmem_to_hbm [thread:$0]  %s242, 256, %s244, %s226, 128, 128, 8
        $region32: #{tpu_custom_call.1} parent=23 // pred_fallthru
          _
      $region24: #{tpu_custom_call.1} parent=5 // pred_fallthru
        _
      %p250 = scmp.le.s32.totalorder 2, %s13
      // Predicated region
      $region33: #{tpu_custom_call.1} parent=5 // pred_check
        %p251 = pneg %p250
      $region34: #{tpu_custom_call.1} parent=5 // pred_check_branch
        %253 = sbr.rel (%p251) target = $region36
      $region35: #{tpu_custom_call.1} parent=5 // pred_region
        %s254 = ssub.s32 %s13, 2
        // Predicated region
        $region37: #{tpu_custom_call.1} parent=35 // pred_check
          %p255 = pneg %p95
        $region38: #{tpu_custom_call.1} parent=35 // pred_check_branch
          %257 = sbr.rel (%p255) target = $region40
        $region39: #{tpu_custom_call.1} parent=35 // pred_region
          %s258 = sand.u32 %s80, 1
          %s259 = scalar_lea.sflag [#allocation4], %s258
          %s260 = sand.u32 %s80, 1
          %s261 = smul.addr %s260, 16
          %s262 = scalar_lea.vmem [#allocation5], %s261
          %264 = dma.done %s259, 256
        $region40: #{tpu_custom_call.1} parent=35 // pred_fallthru
          _
      $region36: #{tpu_custom_call.1} parent=5 // pred_fallthru
        _
    $region6: #{tpu_custom_call.1} parent=1 // loop_footer
      %s17 = sadd.s32 1, %s13
    $region7: #{tpu_custom_call.1} parent=1 // loop_footer_branch
      %12 = sbr.rel target = $region3
    $region8: #{tpu_custom_call.1} parent=1 // loop_exit
      _
    %265 = vsyncpa [#allocation3], 1
    %s266 = scalar_lea.sflag [#allocation3], 1
    %267 = vsyncpa %s266, 1
    %268 = vsyncpa [#allocation4], 1
    %s269 = scalar_lea.sflag [#allocation4], 1
    %270 = vsyncpa %s269, 1

</llo_original>
